<compile_context>
chip_gen: v7x
topology: tpu7x:2x2x1
jax: 0.10.0
libtpu: 0.0.40
codegen_flags: <defaults>
</compile_context>

<pallas_src>
import functools

import jax
import jax.numpy as jnp
from jax.experimental import pallas as pl
from jax.experimental.pallas import tpu as pltpu

EPS = 1e-5            # PyTorch InstanceNorm3d default eps
ROW_MIN = 8           # minimum sublane tile on the (N*C) axis
MAX_ROW_TILE = 512    # upper cap on the row tile
MIN_GRID_STEPS = 8    # try to keep >= this many grid steps (megacore / pipelining)


# ----------------------------------------------------------------------------
# Planning helpers (all host-side, static)
# ----------------------------------------------------------------------------
def _round_up(x, m):
    return ((x + m - 1) // m) * m


def _vmem_capacity_bytes():
    """Generation-aware VMEM capacity; conservative fallback (v7x = 64 MiB)."""
    try:
        return int(pltpu.get_tpu_info().vmem_capacity_bytes)
    except Exception:
        return 64 * 1024 * 1024


def _plan(R, S, itemsize, block_budget):
    """Return ("fused", row_tile, None) or ("tiled", row_tile, s_tile).

    block_budget bounds 4 * row_tile * s_tile * itemsize (double-buffered in + out blocks).
    """
    rows_fit = block_budget // (4 * S * itemsize)
    if rows_fit >= ROW_MIN:
        # Fused single-pass path: full-S blocks, as many rows as fit …
        row_tile = min((rows_fit // ROW_MIN) * ROW_MIN, MAX_ROW_TILE)
        # … but keep some grid steps so the parallel axis can shard across TCs (v7x).
        r8 = _round_up(R, ROW_MIN)
        rows_for_steps = max(ROW_MIN, ((r8 // MIN_GRID_STEPS) // ROW_MIN) * ROW_MIN)
        row_tile = max(ROW_MIN, min(row_tile, rows_for_steps, r8))
        return "fused", row_tile, None

    # S-tiled two-kernel path (stats then apply).
    row_tile = ROW_MIN
    max_s_elems = max(128, block_budget // (4 * row_tile * itemsize))
    s_tile = None
    m = min(S // 128, max(1, max_s_elems // 128))
    while m >= 1:
        cand = 128 * m
        if S % cand == 0:
            s_tile = cand
            break
        m -= 1
    if s_tile is None:
        # TODO(synk): S not divisible by any multiple-of-128 tile; fall back to the
        # full-S fused path (may exceed the VMEM budget for very large odd volumes).
        return "fused", ROW_MIN, None
    return "tiled", row_tile, s_tile


# ----------------------------------------------------------------------------
# Kernels
# ----------------------------------------------------------------------------
def _cin_fused_kernel(x_ref, gamma_ref, beta_ref, o_ref, *, row_tile):
    """One-pass instance norm + conditional affine.

    x_ref:               (row_tile, S)
    gamma_ref, beta_ref: (R_pad, 1)  -- fully resident, sliced per grid step
    """
    i = pl.program_id(0)
    r0 = pl.multiple_of(i * row_tile, row_tile)
    g = gamma_ref[pl.ds(r0, row_tile), :].astype(jnp.float32)
    b = beta_ref[pl.ds(r0, row_tile), :].astype(jnp.float32)

    x = x_ref[...].astype(jnp.float32)
    mean = jnp.mean(x, axis=-1, keepdims=True)
    xc = x - mean
    var = jnp.mean(xc * xc, axis=-1, keepdims=True)     # biased variance (PyTorch IN)
    inv_std = jax.lax.rsqrt(var + EPS)

    # Fused affine: 2 VPU ops per element instead of 4 and no x_hat intermediate.
    scale = (1.0 + g) * inv_std
    shift = b - mean * scale
    o_ref[...] = (x * scale + shift).astype(o_ref.dtype)


def _cin_stats_kernel(x_ref, gamma_ref, beta_ref, scale_ref, shift_ref,
                      mean_acc, m2_acc, *, s_tile, total_s):
    """Per-row (mean, M2) accumulation over S tiles (Chan's stable parallel combine),
    finalized into per-row scale/shift at the last S step."""
    k = pl.program_id(1)

    x = x_ref[...].astype(jnp.float32)
    bmean = jnp.mean(x, axis=-1, keepdims=True)
    bc = x - bmean
    bm2 = jnp.sum(bc * bc, axis=-1, keepdims=True)

    @pl.when(k == 0)
    def _():
        mean_acc[...] = bmean
        m2_acc[...] = bm2

    @pl.when(k > 0)
    def _():
        n_a = k.astype(jnp.float32) * float(s_tile)
        n_b = float(s_tile)
        n = n_a + n_b
        delta = bmean - mean_acc[...]
        mean_acc[...] = mean_acc[...] + delta * (n_b / n)
        m2_acc[...] = m2_acc[...] + bm2 + (delta * delta) * (n_a * n_b / n)

    @pl.when(k == pl.num_programs(1) - 1)
    def _():
        mean = mean_acc[...]
        var = m2_acc[...] * (1.0 / float(total_s))
        inv_std = jax.lax.rsqrt(var + EPS)
        g = gamma_ref[...].astype(jnp.float32)
        b = beta_ref[...].astype(jnp.float32)
        scale = (1.0 + g) * inv_std
        scale_ref[...] = scale
        shift_ref[...] = b - mean * scale


def _cin_apply_kernel(x_ref, scale_ref, shift_ref, o_ref):
    x = x_ref[...].astype(jnp.float32)
    o_ref[...] = (x * scale_ref[...] + shift_ref[...]).astype(o_ref.dtype)


# ----------------------------------------------------------------------------
# pallas_call wrappers
# ----------------------------------------------------------------------------
def _cin_fused(x2d, gamma2d, beta2d, *, row_tile, vmem_limit_bytes):
    R, S = x2d.shape
    grid = (R // row_tile,)
    kernel = functools.partial(_cin_fused_kernel, row_tile=row_tile)
    return pl.pallas_call(
        kernel,
        out_shape=jax.ShapeDtypeStruct((R, S), x2d.dtype),
        grid_spec=pltpu.PrefetchScalarGridSpec(
            num_scalar_prefetch=0,
            grid=grid,
            in_specs=[
                pl.BlockSpec((row_tile, S), lambda i: (i, 0)),
                pl.BlockSpec((R, 1), lambda i: (0, 0)),   # gamma resident
                pl.BlockSpec((R, 1), lambda i: (0, 0)),   # beta  resident
            ],
            out_specs=pl.BlockSpec((row_tile, S), lambda i: (i, 0)),
        ),
        compiler_params=pltpu.CompilerParams(
            dimension_semantics=("parallel",),
            vmem_limit_bytes=vmem_limit_bytes,
        ),
    )(x2d, gamma2d, beta2d)


def _cin_tiled(x2d, gamma2d, beta2d, *, row_tile, s_tile, vmem_limit_bytes):
    R, S = x2d.shape
    grid = (R // row_tile, S // s_tile)

    stats_kernel = functools.partial(_cin_stats_kernel, s_tile=s_tile, total_s=S)
    scale, shift = pl.pallas_call(
        stats_kernel,
        out_shape=(jax.ShapeDtypeStruct((R, 1), jnp.float32),
                   jax.ShapeDtypeStruct((R, 1), jnp.float32)),
        grid_spec=pltpu.PrefetchScalarGridSpec(
            num_scalar_prefetch=0,
            grid=grid,
            in_specs=[
                pl.BlockSpec((row_tile, s_tile), lambda i, k: (i, k)),
                pl.BlockSpec((row_tile, 1), lambda i, k: (i, 0)),
                pl.BlockSpec((row_tile, 1), lambda i, k: (i, 0)),
            ],
            out_specs=[
                pl.BlockSpec((row_tile, 1), lambda i, k: (i, 0)),
                pl.BlockSpec((row_tile, 1), lambda i, k: (i, 0)),
            ],
            scratch_shapes=[
                pltpu.VMEM((row_tile, 1), jnp.float32),   # running mean
                pltpu.VMEM((row_tile, 1), jnp.float32),   # running M2
            ],
        ),
        compiler_params=pltpu.CompilerParams(
            dimension_semantics=("parallel", "arbitrary"),
            vmem_limit_bytes=vmem_limit_bytes,
        ),
    )(x2d, gamma2d, beta2d)

    return pl.pallas_call(
        _cin_apply_kernel,
        out_shape=jax.ShapeDtypeStruct((R, S), x2d.dtype),
        grid_spec=pltpu.PrefetchScalarGridSpec(
            num_scalar_prefetch=0,
            grid=grid,
            in_specs=[
                pl.BlockSpec((row_tile, s_tile), lambda i, k: (i, k)),
                pl.BlockSpec((row_tile, 1), lambda i, k: (i, 0)),
                pl.BlockSpec((row_tile, 1), lambda i, k: (i, 0)),
            ],
            out_specs=pl.BlockSpec((row_tile, s_tile), lambda i, k: (i, k)),
        ),
        compiler_params=pltpu.CompilerParams(
            dimension_semantics=("parallel", "parallel"),
            vmem_limit_bytes=vmem_limit_bytes,
        ),
    )(x2d, scale, shift)


def _cin_pallas(x2d, gamma2d, beta2d, *, block_budget_bytes=None, vmem_limit_bytes=None):
    """x2d: (R, S); gamma2d/beta2d: (R, 1)."""
    R, S = x2d.shape
    itemsize = jnp.dtype(x2d.dtype).itemsize

    cap = _vmem_capacity_bytes()
    if block_budget_bytes is None:
        # e.g. v5e/v6e (128 MiB) -> 64 MiB of block space, v7x (64 MiB) -> 32 MiB.
        block_budget_bytes = min(cap // 2, 64 * 1024 * 1024)
    if vmem_limit_bytes is None:
        vmem_limit_bytes = min((cap * 3) // 4, 96 * 1024 * 1024)

    mode, row_tile, s_tile = _plan(R, S, itemsize, block_budget_bytes)

    R_pad = _round_up(R, row_tile)
    if R_pad != R:
        pad = R_pad - R
        x2d = jnp.pad(x2d, ((0, pad), (0, 0)))
        gamma2d = jnp.pad(gamma2d, ((0, pad), (0, 0)))
        beta2d = jnp.pad(beta2d, ((0, pad), (0, 0)))

    if mode == "fused":
        out = _cin_fused(x2d, gamma2d, beta2d,
                         row_tile=row_tile, vmem_limit_bytes=vmem_limit_bytes)
    else:
        out = _cin_tiled(x2d, gamma2d, beta2d,
                         row_tile=row_tile, s_tile=s_tile,
                         vmem_limit_bytes=vmem_limit_bytes)
    return out[:R] if R_pad != R else out


# ----------------------------------------------------------------------------
# Parameter construction (deterministic, mimics the module's __init__)
# ----------------------------------------------------------------------------
def _linear_init(key, in_f, out_f):
    # PyTorch nn.Linear default: U(-1/sqrt(in_f), 1/sqrt(in_f)) for W and b.
    kw, kb = jax.random.split(key)
    bound = 1.0 / jnp.sqrt(jnp.asarray(in_f, jnp.float32))
    w = jax.random.uniform(kw, (out_f, in_f), jnp.float32, -bound, bound)
    b = jax.random.uniform(kb, (out_f,), jnp.float32, -bound, bound)
    return w, b


def init_params(key, in_channel, latent_dim):
    keys = jax.random.split(key, 5)
    ld2 = latent_dim * 2
    params = {
        "map0": _linear_init(keys[0], 1, ld2),
        "map1": _linear_init(keys[1], ld2, ld2),
        "map2": _linear_init(keys[2], ld2, ld2),
        "map3": _linear_init(keys[3], ld2, ld2),
    }
    sw, sb = _linear_init(keys[4], ld2, in_channel * 2)
    # style.bias.data[:in_channel] = 1 ; style.bias.data[in_channel:] = 0
    sb = sb.at[:in_channel].set(1.0).at[in_channel:].set(0.0)
    params["style"] = (sw, sb)
    return params


def _leaky_relu(x, slope=0.2):
    return jnp.where(x > 0, x, slope * x)


def _linear(x, wb):
    w, b = wb
    return x @ w.T + b


# ----------------------------------------------------------------------------
# Full forward pass (matches the PyTorch module: out = (1 + gamma) * IN(x) + beta)
# ----------------------------------------------------------------------------
@functools.partial(jax.jit, static_argnames=("block_budget_bytes", "vmem_limit_bytes"))
def conditional_instance_norm(params, x, hyperparameter, *,
                              block_budget_bytes=None, vmem_limit_bytes=None):
    """x: (N, C, D, H, W); hyperparameter: (N, 1)."""
    N, C, D, H, W = x.shape

    # --- style MLP (tiny glue matmuls, plain JAX) ---
    h = _leaky_relu(_linear(hyperparameter, params["map0"]))
    h = _leaky_relu(_linear(h, params["map1"]))
    h = _leaky_relu(_linear(h, params["map2"]))
    h = _leaky_relu(_linear(h, params["map3"]))
    style = _linear(h, params["style"])           # (N, 2C)
    gamma = style[:, :C]                          # (N, C)
    beta = style[:, C:]                           # (N, C)

    # --- hot path: instance norm + conditional affine in Pallas ---
    S = D * H * W
    x2d = x.reshape(N * C, S)
    g2d = gamma.reshape(N * C, 1)
    b2d = beta.reshape(N * C, 1)
    out2d = _cin_pallas(x2d, g2d, b2d,
                        block_budget_bytes=block_budget_bytes,
                        vmem_limit_bytes=vmem_limit_bytes)
    return out2d.reshape(N, C, D, H, W)


# ----------------------------------------------------------------------------
# Pure-JAX reference for sanity checking
# ----------------------------------------------------------------------------
def reference(params, x, hyperparameter):
    N, C, D, H, W = x.shape
    h = _leaky_relu(_linear(hyperparameter, params["map0"]))
    h = _leaky_relu(_linear(h, params["map1"]))
    h = _leaky_relu(_linear(h, params["map2"]))
    h = _leaky_relu(_linear(h, params["map3"]))
    style = _linear(h, params["style"])
    gamma = style[:, :C].reshape(N, C, 1, 1, 1)
    beta = style[:, C:].reshape(N, C, 1, 1, 1)
    mean = jnp.mean(x, axis=(2, 3, 4), keepdims=True)
    var = jnp.mean((x - mean) ** 2, axis=(2, 3, 4), keepdims=True)
    x_hat = (x - mean) * jax.lax.rsqrt(var + EPS)
    return (1.0 + gamma) * x_hat + beta


if __name__ == "__main__":
    key = jax.random.PRNGKey(0)
    k_param, k_x, k_h = jax.random.split(key, 3)

    N, C, D, H, W = 2, 4, 4, 8, 16     # N*C = 8 rows, spatial S = 512
    latent_dim = 16

    params = init_params(k_param, in_channel=C, latent_dim=latent_dim)
    x = jax.random.normal(k_x, (N, C, D, H, W), jnp.float32)
    hyper = jax.random.uniform(k_h, (N, 1), jnp.float32)

    ref = reference(params, x, hyper)

    # Default plan (fused single-pass kernel, VMEM-budget-sized row tile).
    out = conditional_instance_norm(params, x, hyper)
    out = jax.block_until_ready(out)
    assert out.shape == (N, C, D, H, W)
    assert jnp.allclose(out, ref, atol=1e-4, rtol=1e-4), "fused path mismatch vs reference"

    # Force the S-tiled (stats + apply) path with a tiny block budget to exercise it too.
    out_t = conditional_instance_norm(params, x, hyper, block_budget_bytes=32 * 1024)
    out_t = jax.block_until_ready(out_t)
    assert jnp.allclose(out_t, ref, atol=1e-4, rtol=1e-4), "tiled path mismatch vs reference"

    print("KERNEL_OK")
</pallas_src>

<mosaic_0001>
module attributes {stable_mosaic.version = 11 : i64} {
  func.func @_cin_fused_kernel(%arg0: i32, %arg1: memref<8x512xf32, #tpu.memory_space<vmem>>, %arg2: memref<8x1xf32, #tpu.memory_space<vmem>>, %arg3: memref<8x1xf32, #tpu.memory_space<vmem>>, %arg4: memref<8x512xf32, #tpu.memory_space<vmem>>) attributes {dimension_semantics = [#tpu.dimension_semantics<parallel>], iteration_bounds = array<i64: 1>, scalar_prefetch = 0 : i64, scratch_operands = 0 : i64, tpu.core_type = #tpu.core_type<tc>, window_params = [{transform_indices = @transform_0, window_bounds = array<i64: 8, 512>}, {pipeline_mode = #tpu.pipeline_mode<synchronous>, transform_indices = @transform_1, window_bounds = array<i64: 8, 1>}, {pipeline_mode = #tpu.pipeline_mode<synchronous>, transform_indices = @transform_2, window_bounds = array<i64: 8, 1>}, {transform_indices = @transform_3, window_bounds = array<i64: 8, 512>}]} {
    %c8_i32 = arith.constant 8 : i32
    %0 = arith.muli %arg0, %c8_i32 : i32
    %1 = tpu.assume_multiple %0, 8 : i32
    %2 = arith.index_cast %1 : i32 to index
    %c0 = arith.constant 0 : index
    %3 = vector.load %arg2[%2, %c0] : memref<8x1xf32, #tpu.memory_space<vmem>>, vector<8x1xf32>
    %4 = arith.index_cast %1 : i32 to index
    %c0_0 = arith.constant 0 : index
    %5 = vector.load %arg3[%4, %c0_0] : memref<8x1xf32, #tpu.memory_space<vmem>>, vector<8x1xf32>
    %c0_1 = arith.constant 0 : index
    %c0_2 = arith.constant 0 : index
    %6 = vector.load %arg1[%c0_1, %c0_2] : memref<8x512xf32, #tpu.memory_space<vmem>>, vector<8x512xf32>
    %cst = arith.constant dense<0.000000e+00> : vector<8xf32>
    %7 = vector.multi_reduction <add>, %6, %cst [1] : vector<8x512xf32> to vector<8xf32>
    %8 = vector.shape_cast %7 : vector<8xf32> to vector<8x1xf32>
    %cst_3 = arith.constant 5.120000e+02 : f32
    %9 = vector.broadcast %cst_3 : f32 to vector<8x1xf32>
    %10 = arith.divf %8, %9 : vector<8x1xf32>
    %11 = vector.broadcast %10 : vector<8x1xf32> to vector<8x512xf32>
    %12 = arith.subf %6, %11 : vector<8x512xf32>
    %13 = arith.mulf %12, %12 : vector<8x512xf32>
    %cst_4 = arith.constant dense<0.000000e+00> : vector<8xf32>
    %14 = vector.multi_reduction <add>, %13, %cst_4 [1] : vector<8x512xf32> to vector<8xf32>
    %15 = vector.shape_cast %14 : vector<8xf32> to vector<8x1xf32>
    %cst_5 = arith.constant 5.120000e+02 : f32
    %16 = vector.broadcast %cst_5 : f32 to vector<8x1xf32>
    %17 = arith.divf %15, %16 : vector<8x1xf32>
    %cst_6 = arith.constant 9.99999974E-6 : f32
    %18 = vector.broadcast %cst_6 : f32 to vector<8x1xf32>
    %19 = arith.addf %17, %18 : vector<8x1xf32>
    %20 = math.rsqrt %19 : vector<8x1xf32>
    %cst_7 = arith.constant 1.000000e+00 : f32
    %21 = vector.broadcast %cst_7 : f32 to vector<8x1xf32>
    %22 = arith.addf %21, %3 : vector<8x1xf32>
    %23 = arith.mulf %22, %20 : vector<8x1xf32>
    %24 = arith.mulf %10, %23 : vector<8x1xf32>
    %25 = arith.subf %5, %24 : vector<8x1xf32>
    %26 = vector.broadcast %23 : vector<8x1xf32> to vector<8x512xf32>
    %27 = arith.mulf %6, %26 : vector<8x512xf32>
    %28 = vector.broadcast %25 : vector<8x1xf32> to vector<8x512xf32>
    %29 = arith.addf %27, %28 : vector<8x512xf32>
    %c0_8 = arith.constant 0 : index
    %c0_9 = arith.constant 0 : index
    %30 = vector.load %arg4[%c0_8, %c0_9] : memref<8x512xf32, #tpu.memory_space<vmem>>, vector<8x512xf32>
    tpu.vector_store %arg4[%c0_8, %c0_9], %29 {strides = array<i32>} : memref<8x512xf32, #tpu.memory_space<vmem>>, vector<8x512xf32>,
    return
  }
  func.func @transform_0(%arg0: i32) -> (i32, i32) {
    %c0_i32 = arith.constant 0 : i32
    %c0_i32_0 = arith.constant 0 : i32
    return %arg0, %c0_i32 : i32, i32
  }
  func.func @transform_1(%arg0: i32) -> (i32, i32) {
    %c0_i32 = arith.constant 0 : i32
    %c0_i32_0 = arith.constant 0 : i32
    %c0_i32_1 = arith.constant 0 : i32
    return %c0_i32, %c0_i32_0 : i32, i32
  }
  func.func @transform_2(%arg0: i32) -> (i32, i32) {
    %c0_i32 = arith.constant 0 : i32
    %c0_i32_0 = arith.constant 0 : i32
    %c0_i32_1 = arith.constant 0 : i32
    return %c0_i32, %c0_i32_0 : i32, i32
  }
  func.func @transform_3(%arg0: i32) -> (i32, i32) {
    %c0_i32 = arith.constant 0 : i32
    %c0_i32_0 = arith.constant 0 : i32
    return %arg0, %c0_i32 : i32, i32
  }
}

</mosaic_0001>

<llo_original>
// kernel: conditional_instance_norm.1
$region0: #{conditional_instance_norm.1}
  #allocation0 [shape = 'u32[]', space=smem, size = 0x4, offset = 0x4, fixed_abs, tag = 'smem constant byte address 0x4 - core index']
  #allocation1 [shape = 'u32[144,128]{1,0:T(1,128)}', space=vmem, size = 0x12000, scoped, tag = 'internal scratch']
  %s0 = inlined_call_operand.vmem [shape: f32[8,512], index: 0, kind: input, shape index: {}]
  %s1 = inlined_call_operand.vmem [shape: f32[8,1], index: 1, kind: input, shape index: {}]
  %s2 = inlined_call_operand.vmem [shape: f32[8,1], index: 2, kind: input, shape index: {}]
  %s3 = inlined_call_operand.vmem [shape: f32[8,512], index: 3, kind: output, shape index: {}]
  %s4 = sld [smem:[#allocation0]]
  $region22: #{conditional_instance_norm.1} parent=0
    _
  %s6 = ssub.s32 1, %s4
  %s7 = scalar_select 0, %s6, %s4
  // Predicated region
  $region2: #{conditional_instance_norm.1} parent=0 // pred_check
    _
  $region3: #{conditional_instance_norm.1} parent=0 // pred_check_branch
    %9 = sbr.rel (0) target = $region5
  $region4: #{conditional_instance_norm.1} parent=0 // pred_region
    _
  $region5: #{conditional_instance_norm.1} parent=0 // pred_fallthru
    _
  // Predicated region
  $region6: #{conditional_instance_norm.1} parent=0 // pred_check
    _
  $region7: #{conditional_instance_norm.1} parent=0 // pred_check_branch
    %11 = sbr.rel (0) target = $region9
  $region8: #{conditional_instance_norm.1} parent=0 // pred_region
    _
  $region9: #{conditional_instance_norm.1} parent=0 // pred_fallthru
    _
  // Predicated region
  $region10: #{conditional_instance_norm.1} parent=0 // pred_check
    _
  $region11: #{conditional_instance_norm.1} parent=0 // pred_check_branch
    %13 = sbr.rel (0) target = $region13
  $region12: #{conditional_instance_norm.1} parent=0 // pred_region
    _
  $region13: #{conditional_instance_norm.1} parent=0 // pred_fallthru
    _
  %s14 = smul.u32 0, 8
  %s15 = scalar_lea.vmem %s1, %s14
  %v16 = vld [vmem:[%s15] sm:$0xff]
  %s17 = scalar_lea.vmem %s2, %s14
  %v18 = vld [vmem:[%s17] sm:$0xff]
  %v19 = vld [vmem:[%s0] sm:$0xff]
  %v20 = vld [vmem:[%s0 + $0x8] sm:$0xff]
  %v21 = vld [vmem:[%s0 + $0x10] sm:$0xff]
  %v22 = vld [vmem:[%s0 + $0x18] sm:$0xff]
  %v23 = vadd.f32 %v19, %v20
  %v24 = vadd.f32 %v23, %v21
  %v25 = vadd.f32 %v24, %v22
  %26 = vadd.xlane.f32.xlu0 %v25
  %v27 = vpop.xlane.xlu0 %26
  %v28 = vrcp.pop 512.0
  %v29 = vmul.f32 %v27, %v28
  %v30 = vsub.f32 %v19, %v29
  %v31 = vsub.f32 %v20, %v29
  %v32 = vsub.f32 %v21, %v29
  %v33 = vsub.f32 %v22, %v29
  %v34 = vmul.f32 %v30, %v30
  %v35 = vmul.f32 %v31, %v31
  %v36 = vmul.f32 %v32, %v32
  %v37 = vmul.f32 %v33, %v33
  %v38 = vadd.f32 %v34, %v35
  %v39 = vadd.f32 %v38, %v36
  %v40 = vadd.f32 %v39, %v37
  %41 = vadd.xlane.f32.xlu0 %v40
  %v42 = vpop.xlane.xlu0 %41
  %v43 = vmul.f32 %v42, %v28
  %v44 = vadd.f32 %v43, 1e-05
  %v45 = vrsqrt.pop %v44
  %v46 = vadd.f32 %v16, 1.0
  %v47 = vmul.f32 %v46, %v45
  %v48 = vmul.f32 %v29, %v47
  %v49 = vsub.f32 %v18, %v48
  %51 = vset.pattern.permute.xlu0 0
  %52 = vperm.xlu0 %51, %v47
  %v53 = vpop.permute.xlu0 %52
  %v55 = vmul.f32 %v19, %v53
  %v56 = vmul.f32 %v20, %v53
  %v57 = vmul.f32 %v21, %v53
  %v58 = vmul.f32 %v22, %v53
  %60 = vset.pattern.permute.xlu0 0
  %61 = vperm.xlu0 %60, %v49
  %v62 = vpop.permute.xlu0 %61
  %v64 = vadd.f32 %v55, %v62
  %v65 = vadd.f32 %v56, %v62
  %v66 = vadd.f32 %v57, %v62
  %v67 = vadd.f32 %v58, %v62
  %68 = vst [vmem:[%s3] sm:$0xff] %v64
  %69 = vst [vmem:[%s3 + $0x8] sm:$0xff] %v65
  %70 = vst [vmem:[%s3 + $0x10] sm:$0xff] %v66
  %71 = vst [vmem:[%s3 + $0x18] sm:$0xff] %v67
  // Predicated region
  $region14: #{conditional_instance_norm.1} parent=0 // pred_check
    _
  $region15: #{conditional_instance_norm.1} parent=0 // pred_check_branch
    %73 = sbr.rel (0) target = $region17
  $region16: #{conditional_instance_norm.1} parent=0 // pred_region
    _
  $region17: #{conditional_instance_norm.1} parent=0 // pred_fallthru
    _
  // Predicated region
  $region18: #{conditional_instance_norm.1} parent=0 // pred_check
    _
  $region19: #{conditional_instance_norm.1} parent=0 // pred_check_branch
    %75 = sbr.rel (0) target = $region21
  $region20: #{conditional_instance_norm.1} parent=0 // pred_region
    _
  $region21: #{conditional_instance_norm.1} parent=0 // pred_fallthru
    _

</llo_original>
